<compile_context>
chip_gen: v7x
topology: tpu7x:2x2x1
jax: 0.10.0
libtpu: 0.0.40
codegen_flags: <defaults>
</compile_context>

<pallas_src>
import functools

import jax
import jax.numpy as jnp
from jax.experimental import pallas as pl
from jax.experimental.pallas import tpu as pltpu


# ----------------------------------------------------------------------------
# 1) Module-faithful kernel: inputs are the already-reduced per-task scalar
#    losses, exactly as the PyTorch forward receives them.
# ----------------------------------------------------------------------------
def _adaptive_loss_kernel(losses_ref, log_vars_ref, out_ref, prec_ref):
    # losses_ref / log_vars_ref: (1, num_tasks) f32 in VMEM
    # out_ref:  (1,) f32 in SMEM          (scalar result)
    # prec_ref: (1, num_tasks) f32 in VMEM (exp(-log_vars), reused by the VJP)
    ls = losses_ref[...]
    lv = log_vars_ref[...]
    precision = jnp.exp(-lv)                 # EUP
    prec_ref[...] = precision
    out_ref[0] = jnp.sum(precision * ls + lv)


def _adaptive_loss_pallas(losses, log_vars):
    """losses: (num_tasks,), log_vars: (num_tasks,) -> (scalar f32, precision)."""
    num_tasks = losses.shape[0]
    if losses.dtype != jnp.float32:
        losses = losses.astype(jnp.float32)
    if log_vars.dtype != jnp.float32:
        log_vars = log_vars.astype(jnp.float32)

    # 1D -> (1, num_tasks): free layout bitcast, no extra HLO fusion.
    ls2 = losses.reshape(1, num_tasks)
    lv2 = log_vars.reshape(1, num_tasks)

    out, precision = pl.pallas_call(
        _adaptive_loss_kernel,
        out_shape=(
            jax.ShapeDtypeStruct((1,), jnp.float32),
            jax.ShapeDtypeStruct((1, num_tasks), jnp.float32),
        ),
        in_specs=[
            pl.BlockSpec(memory_space=pltpu.VMEM),
            pl.BlockSpec(memory_space=pltpu.VMEM),
        ],
        out_specs=(
            pl.BlockSpec(memory_space=pltpu.SMEM),
            pl.BlockSpec(memory_space=pltpu.VMEM),
        ),
        cost_estimate=pl.CostEstimate(
            flops=3 * num_tasks,
            transcendentals=num_tasks,
            bytes_accessed=4 * (3 * num_tasks + 1),
        ),
    )(ls2, lv2)
    return out[0], precision.reshape(num_tasks)


@jax.custom_vjp
def adaptive_loss(losses, log_vars):
    out, _ = _adaptive_loss_pallas(losses, log_vars)
    return out


def _adaptive_loss_fwd(losses, log_vars):
    out, precision = _adaptive_loss_pallas(losses, log_vars)
    # Carry the kernel's f32 precision as the residual (no exp recompute in bwd).
    return out, (losses, log_vars, precision)


def _adaptive_loss_bwd(res, g):
    losses, log_vars, precision = res
    # Backward computed in f32 (matching the forward kernel), cast at the end.
    g32 = jnp.asarray(g, dtype=jnp.float32)
    ls32 = losses.astype(jnp.float32)
    d_losses = g32 * precision
    d_log_vars = g32 * (1.0 - precision * ls32)
    return d_losses.astype(losses.dtype), d_log_vars.astype(log_vars.dtype)


adaptive_loss.defvjp(_adaptive_loss_fwd, _adaptive_loss_bwd)


# ----------------------------------------------------------------------------
# 2) Fused variant (the previous TODO): stream the raw per-task elementwise
#    losses (num_tasks, N), reduce them (mean) in-kernel, then apply the
#    adaptive weighting in the epilogue.  This is the version that actually
#    moves real bytes and amortizes the launch/DMA overhead.
# ----------------------------------------------------------------------------
def _adaptive_loss_fused_kernel(x_ref, lv_ref, out_ref, acc_ref, *, inv_n):
    # x_ref:   (num_tasks, tile)  per-task elementwise losses (this chunk)
    # lv_ref:  (num_tasks, 1)     f32 log_vars (resident every step)
    # out_ref: (1,) f32 SMEM      scalar result
    # acc_ref: (num_tasks, tile)  f32 VMEM accumulator
    step = pl.program_id(0)

    @pl.when(step == 0)
    def _():
        acc_ref[...] = jnp.zeros_like(acc_ref)

    # Inner loop is a single f32 elementwise add: keeps vld/DMA (not VALU)
    # as the binding slot on every generation.
    acc_ref[...] += x_ref[...].astype(jnp.float32)

    @pl.when(step == pl.num_programs(0) - 1)
    def _():
        lv = lv_ref[...]                                      # (num_tasks, 1)
        sums = acc_ref[...].sum(axis=-1, keepdims=True)       # XLU reduce
        means = sums * inv_n
        out_ref[0] = jnp.sum(jnp.exp(-lv) * means + lv)


def adaptive_loss_fused(per_task_losses, log_vars, *, tile=512):
    """per_task_losses: (num_tasks, N) raw elementwise losses; returns scalar
    sum_i exp(-lv_i) * mean(per_task_losses[i]) + lv_i  (== module forward when
    the upstream per-task losses are mean reductions)."""
    num_tasks, n = per_task_losses.shape
    if n % tile != 0 or n < tile:
        tile = n  # single chunk; block == full array dims is always legal
    n_chunks = n // tile

    lv2 = log_vars.astype(jnp.float32).reshape(num_tasks, 1)

    out = pl.pallas_call(
        functools.partial(_adaptive_loss_fused_kernel, inv_n=1.0 / n),
        out_shape=jax.ShapeDtypeStruct((1,), jnp.float32),
        grid=(n_chunks,),
        in_specs=[
            pl.BlockSpec((num_tasks, tile), lambda i: (0, i)),
            pl.BlockSpec((num_tasks, 1), lambda i: (0, 0)),
        ],
        out_specs=pl.BlockSpec(memory_space=pltpu.SMEM),
        scratch_shapes=[pltpu.VMEM((num_tasks, tile), jnp.float32)],
        compiler_params=pltpu.CompilerParams(
            dimension_semantics=("arbitrary",),
            # Tiles here are tiny (few KB double-buffered); an explicit limit
            # keeps the same tiling valid on v7x's 64 MiB VMEM as on v5e/v6e.
            vmem_limit_bytes=32 * 1024 * 1024,
        ),
        cost_estimate=pl.CostEstimate(
            flops=num_tasks * n + 4 * num_tasks,
            transcendentals=num_tasks,
            bytes_accessed=per_task_losses.size * per_task_losses.dtype.itemsize
            + 4 * num_tasks + 4,
        ),
    )(per_task_losses, lv2)
    # TODO(synk): add a custom_vjp for the fused path (d/dx_ij = exp(-lv_i)/N)
    # so the upstream per-element losses stay trainable through this kernel.
    return out[0]


# ----------------------------------------------------------------------------
# Pure-jnp reference
# ----------------------------------------------------------------------------
def adaptive_loss_ref(losses, log_vars):
    return jnp.sum(jnp.exp(-log_vars) * losses + log_vars)


if __name__ == "__main__":
    num_tasks = 3

    # Deterministic parameter init per module __init__: log_vars = zeros(num_tasks)
    log_vars = jnp.zeros((num_tasks,), dtype=jnp.float32)

    key = jax.random.PRNGKey(0)
    k_losses, k_elem = jax.random.split(key)

    # Per-task scalar losses (what the module's forward receives).
    losses = jax.random.uniform(k_losses, (num_tasks,), dtype=jnp.float32)

    out = jax.block_until_ready(adaptive_loss(losses, log_vars))
    ref = adaptive_loss_ref(losses, log_vars)
    assert jnp.allclose(out, ref, rtol=1e-6, atol=1e-6), (out, ref)

    # Non-trivial log_vars to exercise the exp(-log_var) path.
    log_vars2 = jnp.array([0.1, -0.2, 0.3], dtype=jnp.float32)
    out2 = jax.block_until_ready(adaptive_loss(losses, log_vars2))
    ref2 = adaptive_loss_ref(losses, log_vars2)
    assert jnp.allclose(out2, ref2, rtol=1e-6, atol=1e-6), (out2, ref2)

    # Trainability: custom_vjp gradients (using the kernel's f32 precision
    # residual) match the fused-jnp reference.
    g_kern = jax.grad(adaptive_loss, argnums=(0, 1))(losses, log_vars2)
    g_ref = jax.grad(adaptive_loss_ref, argnums=(0, 1))(losses, log_vars2)
    g_kern = jax.block_until_ready(g_kern)
    assert jnp.allclose(g_kern[0], g_ref[0], rtol=1e-6, atol=1e-6), (g_kern[0], g_ref[0])
    assert jnp.allclose(g_kern[1], g_ref[1], rtol=1e-6, atol=1e-6), (g_kern[1], g_ref[1])

    # Fused variant: raw per-task elementwise losses reduced in-kernel.
    n_elems = 2048
    per_task = jax.random.uniform(k_elem, (num_tasks, n_elems), dtype=jnp.float32)
    out_fused = jax.block_until_ready(adaptive_loss_fused(per_task, log_vars2))
    ref_fused = adaptive_loss_ref(jnp.mean(per_task, axis=-1), log_vars2)
    assert jnp.allclose(out_fused, ref_fused, rtol=1e-5, atol=1e-5), (out_fused, ref_fused)

    print("KERNEL_OK")
</pallas_src>

<mosaic_0001>
module attributes {stable_mosaic.version = 11 : i64} {
  func.func @_adaptive_loss_kernel(%arg0: memref<1x3xf32, #tpu.memory_space<vmem>>, %arg1: memref<1x3xf32, #tpu.memory_space<vmem>>, %arg2: memref<1xf32, #tpu.memory_space<smem>>, %arg3: memref<1x3xf32, #tpu.memory_space<vmem>>) attributes {dimension_semantics = [], scalar_prefetch = 0 : i64, scratch_operands = 0 : i64, tpu.core_type = #tpu.core_type<tc>} {
    %c0 = arith.constant 0 : index
    %c0_0 = arith.constant 0 : index
    %0 = vector.load %arg0[%c0, %c0_0] : memref<1x3xf32, #tpu.memory_space<vmem>>, vector<1x3xf32>
    %c0_1 = arith.constant 0 : index
    %c0_2 = arith.constant 0 : index
    %1 = vector.load %arg1[%c0_1, %c0_2] : memref<1x3xf32, #tpu.memory_space<vmem>>, vector<1x3xf32>
    %cst = arith.constant 0.000000e+00 : f32
    %2 = vector.broadcast %cst : f32 to vector<1x3xf32>
    %3 = arith.subf %2, %1 : vector<1x3xf32>
    %4 = math.exp %3 : vector<1x3xf32>
    %c0_3 = arith.constant 0 : index
    %c0_4 = arith.constant 0 : index
    %5 = vector.load %arg3[%c0_3, %c0_4] : memref<1x3xf32, #tpu.memory_space<vmem>>, vector<1x3xf32>
    tpu.vector_store %arg3[%c0_3, %c0_4], %4 {strides = array<i32>} : memref<1x3xf32, #tpu.memory_space<vmem>>, vector<1x3xf32>,
    %6 = arith.mulf %4, %0 : vector<1x3xf32>
    %7 = arith.addf %6, %1 : vector<1x3xf32>
    %8 = vector.shape_cast %7 : vector<1x3xf32> to vector<1x1x3xf32>
    %cst_5 = arith.constant dense<0.000000e+00> : vector<1xf32>
    %9 = vector.multi_reduction <add>, %8, %cst_5 [1, 2] : vector<1x1x3xf32> to vector<1xf32>
    %10 = vector.shape_cast %9 : vector<1xf32> to vector<1x1x1xf32>
    %11 = vector.extract %10[0, 0, 0] : f32 from vector<1x1x1xf32>
    %c0_6 = arith.constant 0 : index
    %12 = memref.load %arg2[%c0_6] : memref<1xf32, #tpu.memory_space<smem>>
    memref.store %11, %arg2[%c0_6] : memref<1xf32, #tpu.memory_space<smem>>
    return
  }
}

</mosaic_0001>

<llo_original>
// kernel: tpu_custom_call.1
$region0: #{tpu_custom_call.1}
  #allocation0 [shape = 'u32[]', space=smem, size = 0x4, offset = 0x4, fixed_abs, tag = 'smem constant byte address 0x4 - core index']
  #allocation1 [shape = 'u32[144,128]{1,0:T(1,128)}', space=vmem, size = 0x12000, scoped, tag = 'internal scratch']
  %s0 = inlined_call_operand.hbm [shape: f32[1,3], index: 0, kind: input, shape index: {}]
  %s1 = inlined_call_operand.vmem [shape: f32[1,3], index: 1, kind: input, shape index: {}]
  %s2 = inlined_call_operand.hbm [shape: f32[1], index: 2, kind: output, shape index: {0}]
  %s3 = inlined_call_operand.hbm [shape: f32[1,3], index: 3, kind: output, shape index: {1}]
  %4 = xla_tuple %s2, %s3
  %s5 = sld [smem:[#allocation0]]
  $region30: #{tpu_custom_call.1} parent=0
    _
  %s7 = ssub.s32 1, %s5
  %s8 = scalar_select 0, %s7, %s5
  $region1: #{tpu_custom_call.1} parent=0
    #allocation2 [shape = 'u8[512]{0}', space=vmem, size = 0x400, scoped, tag = 'input window, operand 0, single buffered']
    #allocation3 [shape = 's32[1]{0}', space=sflag, size = 0x4, scoped, tag = 'scoped memory for tpu_custom_call.1']
    #allocation4 [shape = 's32[1]{0}', space=sflag, size = 0x4, scoped, tag = 'scoped memory for tpu_custom_call.1']
    #allocation5 [shape = 's32[1]{0}', space=sflag, size = 0x4, scoped, tag = 'scoped memory for tpu_custom_call.1']
    #allocation6 [shape = 'u8[512]{0}', space=smem, size = 0x200, scoped, tag = 'output window, operand 0, single buffered']
    #allocation7 [shape = 'u8[512]{0}', space=vmem, size = 0x400, scoped, tag = 'output window, operand 1, single buffered']
    %9 = vsyncpa [#allocation3], 0
    %10 = vsyncpa [#allocation5], 0
    %11 = vsyncpa [#allocation4], 0
    // Predicated region
    $region2: #{tpu_custom_call.1} parent=1 // pred_check
      _
    $region3: #{tpu_custom_call.1} parent=1 // pred_check_branch
      %13 = sbr.rel (0) target = $region5
    $region4: #{tpu_custom_call.1} parent=1 // pred_region
      %s15 = ssub.s32 16, 16
      %16 = vsyncadd [#allocation3], %s15
      %s18 = sshll.u32 [#allocation2], 4
      %s19 = int_to_ptr.vmem [resolvable:$true] %s18
      %21 = dma.hbm_to_vmem [thread:$0]  %s0, 16, %s19, [#allocation3]
    $region5: #{tpu_custom_call.1} parent=1 // pred_fallthru
      _
    // Predicated region
    $region6: #{tpu_custom_call.1} parent=1 // pred_check
      _
    $region7: #{tpu_custom_call.1} parent=1 // pred_check_branch
      %23 = sbr.rel (0) target = $region9
    $region8: #{tpu_custom_call.1} parent=1 // pred_region
      _
    $region9: #{tpu_custom_call.1} parent=1 // pred_fallthru
      _
    // Predicated region
    $region10: #{tpu_custom_call.1} parent=1 // pred_check
      _
    $region11: #{tpu_custom_call.1} parent=1 // pred_check_branch
      %25 = sbr.rel (0) target = $region13
    $region12: #{tpu_custom_call.1} parent=1 // pred_region
      %26 = dma.done [#allocation3], 16
    $region13: #{tpu_custom_call.1} parent=1 // pred_fallthru
      _
    %v27 = vld [vmem:[#allocation2] sm:$0x1]
    %v28 = vld [vmem:[%s1] sm:$0x1]
    %v29 = vsub.f32 0.0, %v28
    %v30 = vmul.f32 %v29, 1.442695
    %v31 = vpow.pop %v30
    %vm32 = vcmask 16384
    %33 = vst.msk [vmem:[#allocation7] sm:$0x1] %vm32, %v31
    %v34 = vmul.f32 %v31, %v27
    %v35 = vadd.f32 %v34, %v28
    %v36 = vsel %vm32, %v35, 0.0
    %37 = vadd.xlane.f32.xlu0 %v36
    %v38 = vpop.xlane.xlu0 %37
    %v39 = vrot.slane %v38, 4
    %v40 = vadd.f32 %v38, %v39
    %v41 = vrot.slane %v40, 2
    %v42 = vadd.f32 %v40, %v41
    %v43 = vrot.slane %v42, 1
    %v44 = vadd.f32 %v42, %v43
    %s45 = vtos %v44
    %s46 = scalar_lea.smem [#allocation6], 0
    %47 = sst [smem:[%s46]] %s45
    // Predicated region
    $region14: #{tpu_custom_call.1} parent=1 // pred_check
      _
    $region15: #{tpu_custom_call.1} parent=1 // pred_check_branch
      %49 = sbr.rel (0) target = $region17
    $region16: #{tpu_custom_call.1} parent=1 // pred_region
      %s51 = ssub.s32 16, 16
      %52 = vsyncadd [#allocation5], %s51
      %55 = dma.smem_to_hbm [#allocation6], 16, %s2, [#allocation5]
    $region17: #{tpu_custom_call.1} parent=1 // pred_fallthru
      _
    // Predicated region
    $region18: #{tpu_custom_call.1} parent=1 // pred_check
      _
    $region19: #{tpu_custom_call.1} parent=1 // pred_check_branch
      %57 = sbr.rel (0) target = $region21
    $region20: #{tpu_custom_call.1} parent=1 // pred_region
      %s59 = ssub.s32 16, 16
      %60 = vsyncadd [#allocation4], %s59
      %s62 = sshll.u32 [#allocation7], 4
      %s63 = int_to_ptr.vmem [resolvable:$true] %s62
      %65 = dma.vmem_to_hbm [thread:$0]  %s63, 16, %s3, [#allocation4]
    $region21: #{tpu_custom_call.1} parent=1 // pred_fallthru
      _
    // Predicated region
    $region22: #{tpu_custom_call.1} parent=1 // pred_check
      _
    $region23: #{tpu_custom_call.1} parent=1 // pred_check_branch
      %67 = sbr.rel (0) target = $region25
    $region24: #{tpu_custom_call.1} parent=1 // pred_region
      %68 = dma.done [#allocation5], 16
    $region25: #{tpu_custom_call.1} parent=1 // pred_fallthru
      _
    // Predicated region
    $region26: #{tpu_custom_call.1} parent=1 // pred_check
      _
    $region27: #{tpu_custom_call.1} parent=1 // pred_check_branch
      %70 = sbr.rel (0) target = $region29
    $region28: #{tpu_custom_call.1} parent=1 // pred_region
      %71 = dma.done [#allocation4], 16
    $region29: #{tpu_custom_call.1} parent=1 // pred_fallthru
      _
    %72 = sfence
    %73 = vsyncpa [#allocation3], 1
    %74 = vsyncpa [#allocation4], 1
    %75 = vsyncpa [#allocation5], 1

</llo_original>
